<compile_context>
chip_gen: v7x
topology: tpu7x:2x2x1
jax: 0.10.0
libtpu: 0.0.40
codegen_flags: <defaults>
</compile_context>

<pallas_src>
import functools

import jax
import jax.numpy as jnp
from jax.experimental import pallas as pl
from jax.experimental.pallas import tpu as pltpu

LANE = 128  # TPU lane width


def _round_up(x, m):
    return (x + m - 1) // m * m


def actor_kernel(x_ref, w1_ref, b1_ref, w2_ref, b2_ref, w3_ref, b3_ref, out_ref):
    # fc1 + ReLU  (bf16 operands, f32 accumulation, f32 epilogue)
    h1 = jnp.dot(x_ref[...], w1_ref[...], preferred_element_type=jnp.float32)
    h1 = jnp.maximum(h1 + b1_ref[...], 0.0)
    # fc2 + ReLU
    h2 = jnp.dot(h1.astype(jnp.bfloat16), w2_ref[...],
                 preferred_element_type=jnp.float32)
    h2 = jnp.maximum(h2 + b2_ref[...], 0.0)
    # pi (logits, lane-padded to 128 columns; padded columns carry a huge
    # negative bias so they vanish under softmax)
    logits = jnp.dot(h2.astype(jnp.bfloat16), w3_ref[...],
                     preferred_element_type=jnp.float32)
    logits = logits + b3_ref[...]
    # numerically stable softmax over actions (dim=1)
    m = jnp.max(logits, axis=-1, keepdims=True)
    e = jnp.exp(logits - m)
    denom = jnp.sum(e, axis=-1, keepdims=True)
    # EUP reciprocal instead of VALU divide; approx=False keeps exact sums.
    out_ref[...] = (e * pl.reciprocal(denom, approx=False)).astype(out_ref.dtype)


@functools.partial(jax.jit, static_argnames=("batch_tile",))
def actor_forward(state, w1, b1, w2, b2, w3, b3, *, batch_tile=256):
    """state: (B, input_dims); weights (in, out); biases (1, out). Returns (B, n_actions) f32 probs."""
    B, input_dims = state.shape
    fc1_dims = w1.shape[1]
    fc2_dims = w2.shape[1]
    n_actions = w3.shape[1]

    # ---- batch tiling (grid over rows) ----
    tb = min(batch_tile, _round_up(B, 8))
    b_pad = _round_up(B, tb)
    if b_pad != B:
        state = jnp.pad(state, ((0, b_pad - B), (0, 0)))
    n_tiles = pl.cdiv(b_pad, tb)

    # ---- lane-pad the action dimension to 128 for dense output stores ----
    n_pad = _round_up(max(n_actions, LANE), LANE)
    if n_pad != n_actions:
        w3 = jnp.pad(w3, ((0, 0), (0, n_pad - n_actions)))
        # large negative bias on padded logits -> exp() underflows to 0
        b3 = jnp.pad(b3, ((0, 0), (0, n_pad - n_actions)),
                     constant_values=-1e9)

    # ---- dtype policy: bf16 on the MXU, f32 everywhere else ----
    x_bf = state.astype(jnp.bfloat16)
    w1_bf, w2_bf, w3_bf = (w.astype(jnp.bfloat16) for w in (w1, w2, w3))
    b1_f, b2_f, b3_f = (b.astype(jnp.float32) for b in (b1, b2, b3))

    replicated = lambda shape: pl.BlockSpec(shape, lambda i: (0, 0))

    flops = 2 * b_pad * (input_dims * fc1_dims + fc1_dims * fc2_dims
                         + fc2_dims * n_pad)
    bytes_accessed = (x_bf.size * 2 + w1_bf.size * 2 + w2_bf.size * 2
                      + w3_bf.size * 2 + (b1_f.size + b2_f.size + b3_f.size) * 4
                      + b_pad * n_pad * 4)

    out_padded = pl.pallas_call(
        actor_kernel,
        out_shape=jax.ShapeDtypeStruct((b_pad, n_pad), jnp.float32),
        grid=(n_tiles,),
        in_specs=[
            pl.BlockSpec((tb, input_dims), lambda i: (i, 0)),   # state tile
            replicated((input_dims, fc1_dims)),                  # w1
            replicated((1, fc1_dims)),                           # b1
            replicated((fc1_dims, fc2_dims)),                    # w2
            replicated((1, fc2_dims)),                           # b2
            replicated((fc2_dims, n_pad)),                       # w3 (lane-padded)
            replicated((1, n_pad)),                              # b3 (lane-padded)
        ],
        out_specs=pl.BlockSpec((tb, n_pad), lambda i: (i, 0)),
        compiler_params=pltpu.CompilerParams(
            dimension_semantics=("parallel",)),                  # megacore on v7x
        cost_estimate=pl.CostEstimate(
            flops=flops,
            transcendentals=b_pad * n_pad,
            bytes_accessed=bytes_accessed),
    )(x_bf, w1_bf, b1_f, w2_bf, b2_f, w3_bf, b3_f)

    # slice away batch padding and lane padding
    return out_padded[:B, :n_actions]


def init_params(key, input_dims, fc1_dims, fc2_dims, n_actions):
    """Deterministic init mimicking nn.Linear's uniform(-1/sqrt(fan_in), +)."""
    ks = jax.random.split(key, 6)

    def linear(kw, kb, fan_in, fan_out):
        bound = 1.0 / jnp.sqrt(jnp.float32(fan_in))
        # stored transposed: (in, out)
        w = jax.random.uniform(kw, (fan_in, fan_out), jnp.float32, -bound, bound)
        b = jax.random.uniform(kb, (1, fan_out), jnp.float32, -bound, bound)
        return w, b

    w1, b1 = linear(ks[0], ks[1], input_dims, fc1_dims)
    w2, b2 = linear(ks[2], ks[3], fc1_dims, fc2_dims)
    w3, b3 = linear(ks[4], ks[5], fc2_dims, n_actions)
    return w1, b1, w2, b2, w3, b3


if __name__ == "__main__":
    # Small shapes consistent with the module's forward.  Hidden dims use 128
    # (lane-dense) per the perf review; the tiny n_actions is lane-padded
    # inside the wrapper.
    batch = 8
    input_dims = 32
    fc1_dims = 128
    fc2_dims = 128
    n_actions = 8

    key = jax.random.PRNGKey(0)
    k_state, k_params = jax.random.split(key)

    state = jax.random.normal(k_state, (batch, input_dims), jnp.float32)
    params = init_params(k_params, input_dims, fc1_dims, fc2_dims, n_actions)

    pi = actor_forward(state, *params)
    jax.block_until_ready(pi)

    # Pure-JAX f32 reference check (bf16 matmul operands -> loosened tolerance).
    w1, b1, w2, b2, w3, b3 = params
    h1 = jnp.maximum(state @ w1 + b1, 0.0)
    h2 = jnp.maximum(h1 @ w2 + b2, 0.0)
    ref = jax.nn.softmax(h2 @ w3 + b3, axis=1)
    assert pi.shape == (batch, n_actions)
    assert jnp.allclose(pi, ref, atol=1e-2), "mismatch vs reference"
    assert jnp.allclose(jnp.sum(pi, axis=1), 1.0, atol=1e-4)

    print("KERNEL_OK")
</pallas_src>

<mosaic_0001>
module attributes {stable_mosaic.version = 11 : i64} {
  func.func @actor_kernel(%arg0: i32, %arg1: memref<8x32xbf16, #tpu.memory_space<vmem>>, %arg2: memref<32x128xbf16, #tpu.memory_space<vmem>>, %arg3: memref<1x128xf32, #tpu.memory_space<vmem>>, %arg4: memref<128x128xbf16, #tpu.memory_space<vmem>>, %arg5: memref<1x128xf32, #tpu.memory_space<vmem>>, %arg6: memref<128x128xbf16, #tpu.memory_space<vmem>>, %arg7: memref<1x128xf32, #tpu.memory_space<vmem>>, %arg8: memref<8x128xf32, #tpu.memory_space<vmem>>) attributes {dimension_semantics = [#tpu.dimension_semantics<parallel>], iteration_bounds = array<i64: 1>, scalar_prefetch = 0 : i64, scratch_operands = 0 : i64, tpu.core_type = #tpu.core_type<tc>, window_params = [{transform_indices = @transform_0, window_bounds = array<i64: 8, 32>}, {pipeline_mode = #tpu.pipeline_mode<synchronous>, transform_indices = @transform_1, window_bounds = array<i64: 32, 128>}, {pipeline_mode = #tpu.pipeline_mode<synchronous>, transform_indices = @transform_2, window_bounds = array<i64: 1, 128>}, {pipeline_mode = #tpu.pipeline_mode<synchronous>, transform_indices = @transform_3, window_bounds = array<i64: 128, 128>}, {pipeline_mode = #tpu.pipeline_mode<synchronous>, transform_indices = @transform_4, window_bounds = array<i64: 1, 128>}, {pipeline_mode = #tpu.pipeline_mode<synchronous>, transform_indices = @transform_5, window_bounds = array<i64: 128, 128>}, {pipeline_mode = #tpu.pipeline_mode<synchronous>, transform_indices = @transform_6, window_bounds = array<i64: 1, 128>}, {transform_indices = @transform_7, window_bounds = array<i64: 8, 128>}]} {
    %c0 = arith.constant 0 : index
    %c0_0 = arith.constant 0 : index
    %0 = vector.load %arg1[%c0, %c0_0] : memref<8x32xbf16, #tpu.memory_space<vmem>>, vector<8x32xbf16>
    %c0_1 = arith.constant 0 : index
    %c0_2 = arith.constant 0 : index
    %1 = vector.load %arg2[%c0_1, %c0_2] : memref<32x128xbf16, #tpu.memory_space<vmem>>, vector<32x128xbf16>
    %cst = arith.constant dense<0.000000e+00> : vector<8x128xf32>
    %2 = tpu.matmul %0, %1, %cst {dimension_numbers = #tpu.dot_dimension_numbers<[1], [0], [0], [1], [0, 0, 1, 1], [], []>} : vector<8x32xbf16>, vector<32x128xbf16>, vector<8x128xf32> -> vector<8x128xf32>
    %c0_3 = arith.constant 0 : index
    %c0_4 = arith.constant 0 : index
    %3 = vector.load %arg3[%c0_3, %c0_4] : memref<1x128xf32, #tpu.memory_space<vmem>>, vector<1x128xf32>
    %4 = vector.broadcast %3 : vector<1x128xf32> to vector<8x128xf32>
    %5 = arith.addf %2, %4 : vector<8x128xf32>
    %cst_5 = arith.constant 0.000000e+00 : f32
    %6 = vector.broadcast %cst_5 : f32 to vector<8x128xf32>
    %7 = arith.maximumf %5, %6 : vector<8x128xf32>
    %8 = arith.truncf %7 : vector<8x128xf32> to vector<8x128xbf16>
    %c0_6 = arith.constant 0 : index
    %c0_7 = arith.constant 0 : index
    %9 = vector.load %arg4[%c0_6, %c0_7] : memref<128x128xbf16, #tpu.memory_space<vmem>>, vector<128x128xbf16>
    %cst_8 = arith.constant dense<0.000000e+00> : vector<8x128xf32>
    %10 = tpu.matmul %8, %9, %cst_8 {dimension_numbers = #tpu.dot_dimension_numbers<[1], [0], [0], [1], [0, 0, 1, 1], [], []>} : vector<8x128xbf16>, vector<128x128xbf16>, vector<8x128xf32> -> vector<8x128xf32>
    %c0_9 = arith.constant 0 : index
    %c0_10 = arith.constant 0 : index
    %11 = vector.load %arg5[%c0_9, %c0_10] : memref<1x128xf32, #tpu.memory_space<vmem>>, vector<1x128xf32>
    %12 = vector.broadcast %11 : vector<1x128xf32> to vector<8x128xf32>
    %13 = arith.addf %10, %12 : vector<8x128xf32>
    %cst_11 = arith.constant 0.000000e+00 : f32
    %14 = vector.broadcast %cst_11 : f32 to vector<8x128xf32>
    %15 = arith.maximumf %13, %14 : vector<8x128xf32>
    %16 = arith.truncf %15 : vector<8x128xf32> to vector<8x128xbf16>
    %c0_12 = arith.constant 0 : index
    %c0_13 = arith.constant 0 : index
    %17 = vector.load %arg6[%c0_12, %c0_13] : memref<128x128xbf16, #tpu.memory_space<vmem>>, vector<128x128xbf16>
    %cst_14 = arith.constant dense<0.000000e+00> : vector<8x128xf32>
    %18 = tpu.matmul %16, %17, %cst_14 {dimension_numbers = #tpu.dot_dimension_numbers<[1], [0], [0], [1], [0, 0, 1, 1], [], []>} : vector<8x128xbf16>, vector<128x128xbf16>, vector<8x128xf32> -> vector<8x128xf32>
    %c0_15 = arith.constant 0 : index
    %c0_16 = arith.constant 0 : index
    %19 = vector.load %arg7[%c0_15, %c0_16] : memref<1x128xf32, #tpu.memory_space<vmem>>, vector<1x128xf32>
    %20 = vector.broadcast %19 : vector<1x128xf32> to vector<8x128xf32>
    %21 = arith.addf %18, %20 : vector<8x128xf32>
    %cst_17 = arith.constant dense<0xFF800000> : vector<8xf32>
    %22 = vector.multi_reduction <maximumf>, %21, %cst_17 [1] : vector<8x128xf32> to vector<8xf32>
    %23 = vector.shape_cast %22 : vector<8xf32> to vector<8x1xf32>
    %24 = vector.broadcast %23 : vector<8x1xf32> to vector<8x128xf32>
    %25 = arith.subf %21, %24 : vector<8x128xf32>
    %26 = math.exp %25 : vector<8x128xf32>
    %cst_18 = arith.constant dense<0.000000e+00> : vector<8xf32>
    %27 = vector.multi_reduction <add>, %26, %cst_18 [1] : vector<8x128xf32> to vector<8xf32>
    %28 = vector.shape_cast %27 : vector<8xf32> to vector<8x1xf32>
    %29 = tpu.reciprocal %28 : vector<8x1xf32> -> vector<8x1xf32>
    %30 = vector.broadcast %29 : vector<8x1xf32> to vector<8x128xf32>
    %31 = arith.mulf %26, %30 : vector<8x128xf32>
    %c0_19 = arith.constant 0 : index
    %c0_20 = arith.constant 0 : index
    %32 = vector.load %arg8[%c0_19, %c0_20] : memref<8x128xf32, #tpu.memory_space<vmem>>, vector<8x128xf32>
    tpu.vector_store %arg8[%c0_19, %c0_20], %31 {strides = array<i32>} : memref<8x128xf32, #tpu.memory_space<vmem>>, vector<8x128xf32>,
    return
  }
  func.func @transform_0(%arg0: i32) -> (i32, i32) {
    %c0_i32 = arith.constant 0 : i32
    %c0_i32_0 = arith.constant 0 : i32
    return %arg0, %c0_i32 : i32, i32
  }
  func.func @transform_1(%arg0: i32) -> (i32, i32) {
    %c0_i32 = arith.constant 0 : i32
    %c0_i32_0 = arith.constant 0 : i32
    %c0_i32_1 = arith.constant 0 : i32
    return %c0_i32, %c0_i32_0 : i32, i32
  }
  func.func @transform_2(%arg0: i32) -> (i32, i32) {
    %c0_i32 = arith.constant 0 : i32
    %c0_i32_0 = arith.constant 0 : i32
    %c0_i32_1 = arith.constant 0 : i32
    return %c0_i32, %c0_i32_0 : i32, i32
  }
  func.func @transform_3(%arg0: i32) -> (i32, i32) {
    %c0_i32 = arith.constant 0 : i32
    %c0_i32_0 = arith.constant 0 : i32
    %c0_i32_1 = arith.constant 0 : i32
    return %c0_i32, %c0_i32_0 : i32, i32
  }
  func.func @transform_4(%arg0: i32) -> (i32, i32) {
    %c0_i32 = arith.constant 0 : i32
    %c0_i32_0 = arith.constant 0 : i32
    %c0_i32_1 = arith.constant 0 : i32
    return %c0_i32, %c0_i32_0 : i32, i32
  }
  func.func @transform_5(%arg0: i32) -> (i32, i32) {
    %c0_i32 = arith.constant 0 : i32
    %c0_i32_0 = arith.constant 0 : i32
    %c0_i32_1 = arith.constant 0 : i32
    return %c0_i32, %c0_i32_0 : i32, i32
  }
  func.func @transform_6(%arg0: i32) -> (i32, i32) {
    %c0_i32 = arith.constant 0 : i32
    %c0_i32_0 = arith.constant 0 : i32
    %c0_i32_1 = arith.constant 0 : i32
    return %c0_i32, %c0_i32_0 : i32, i32
  }
  func.func @transform_7(%arg0: i32) -> (i32, i32) {
    %c0_i32 = arith.constant 0 : i32
    %c0_i32_0 = arith.constant 0 : i32
    return %arg0, %c0_i32 : i32, i32
  }
}

</mosaic_0001>

<llo_original>
// kernel: actor_forward.1
$region0: #{actor_forward.1}
  #allocation0 [shape = 'u32[]', space=smem, size = 0x4, offset = 0x4, fixed_abs, tag = 'smem constant byte address 0x4 - core index']
  #allocation1 [shape = 'u32[144,128]{1,0:T(1,128)}', space=vmem, size = 0x12000, scoped, tag = 'internal scratch']
  %s0 = inlined_call_operand.vmem [shape: bf16[8,32], index: 0, kind: input, shape index: {}]
  %s1 = inlined_call_operand.vmem [shape: bf16[32,128], index: 1, kind: input, shape index: {}]
  %s2 = inlined_call_operand.vmem [shape: f32[1,128], index: 2, kind: input, shape index: {}]
  %s3 = inlined_call_operand.vmem [shape: bf16[128,128], index: 3, kind: input, shape index: {}]
  %s4 = inlined_call_operand.vmem [shape: f32[1,128], index: 4, kind: input, shape index: {}]
  %s5 = inlined_call_operand.vmem [shape: bf16[128,128], index: 5, kind: input, shape index: {}]
  %s6 = inlined_call_operand.vmem [shape: f32[1,128], index: 6, kind: input, shape index: {}]
  %s7 = inlined_call_operand.hbm [shape: f32[8,128], index: 7, kind: output, shape index: {}]
  %s8 = sld [smem:[#allocation0]]
  $region38: #{actor_forward.1} parent=0
    _
  %s10 = ssub.s32 1, %s8
  %s11 = scalar_select 0, %s10, %s8
  $region1: #{actor_forward.1} parent=0
    #allocation2 [shape = 'u8[4096]{0}', space=vmem, size = 0x1000, scoped, tag = 'output window, operand 0, single buffered']
    #allocation3 [shape = 's32[1]{0}', space=sflag, size = 0x4, scoped, tag = 'scoped memory for actor_forward.1']
    %12 = vsyncpa [#allocation3], 0
    // Predicated region
    $region2: #{actor_forward.1} parent=1 // pred_check
      _
    $region3: #{actor_forward.1} parent=1 // pred_check_branch
      %14 = sbr.rel (0) target = $region5
    $region4: #{actor_forward.1} parent=1 // pred_region
      _
    $region5: #{actor_forward.1} parent=1 // pred_fallthru
      _
    // Predicated region
    $region6: #{actor_forward.1} parent=1 // pred_check
      _
    $region7: #{actor_forward.1} parent=1 // pred_check_branch
      %16 = sbr.rel (0) target = $region9
    $region8: #{actor_forward.1} parent=1 // pred_region
      _
    $region9: #{actor_forward.1} parent=1 // pred_fallthru
      _
    // Predicated region
    $region10: #{actor_forward.1} parent=1 // pred_check
      _
    $region11: #{actor_forward.1} parent=1 // pred_check_branch
      %18 = sbr.rel (0) target = $region13
    $region12: #{actor_forward.1} parent=1 // pred_region
      _
    $region13: #{actor_forward.1} parent=1 // pred_fallthru
      _
    // Predicated region
    $region14: #{actor_forward.1} parent=1 // pred_check
      _
    $region15: #{actor_forward.1} parent=1 // pred_check_branch
      %20 = sbr.rel (0) target = $region17
    $region16: #{actor_forward.1} parent=1 // pred_region
      _
    $region17: #{actor_forward.1} parent=1 // pred_fallthru
      _
    // Predicated region
    $region18: #{actor_forward.1} parent=1 // pred_check
      _
    $region19: #{actor_forward.1} parent=1 // pred_check_branch
      %22 = sbr.rel (0) target = $region21
    $region20: #{actor_forward.1} parent=1 // pred_region
      _
    $region21: #{actor_forward.1} parent=1 // pred_fallthru
      _
    // Predicated region
    $region22: #{actor_forward.1} parent=1 // pred_check
      _
    $region23: #{actor_forward.1} parent=1 // pred_check_branch
      %24 = sbr.rel (0) target = $region25
    $region24: #{actor_forward.1} parent=1 // pred_region
      _
    $region25: #{actor_forward.1} parent=1 // pred_fallthru
      _
    // Predicated region
    $region26: #{actor_forward.1} parent=1 // pred_check
      _
    $region27: #{actor_forward.1} parent=1 // pred_check_branch
      %26 = sbr.rel (0) target = $region29
    $region28: #{actor_forward.1} parent=1 // pred_region
      _
    $region29: #{actor_forward.1} parent=1 // pred_fallthru
      _
    %v28 = vld [vmem:[%s0] sm:$0xf]
    %v29 = vld [vmem:[%s1] sm:$0xf]
    %v30 = vld [vmem:[%s1 + $0x4] sm:$0xf]
    %v31 = vld [vmem:[%s1 + $0x8] sm:$0xf]
    %v32 = vld [vmem:[%s1 + $0xc] sm:$0xf]
    %v33 = vld [vmem:[%s2] sm:$0x1]
    %v35 = vlaneseq
    %v36 = vshrl.u32 %v35, 7
    %v37 = vsub.s32 0, %v36
    %v38 = vrot.slane %v33, %v37
    %v44 = vunpack.c.l.b16 %v29
    %v45 = vunpack.c.l.b16 %v30
    %v46 = vunpack.c.l.b16 %v31
    %v47 = vunpack.c.l.b16 %v32
    %v48 = vpack.c.b16 %v45, %v44
    %v49 = vpack.c.b16 %v47, %v46
    %vm52 = vcmask 261120
    %v54 = vsel %vm52, %v28, 0
    %56 = vmatprep.subr.bf16.mxu0 0
    %57 = vmatpush1.bf16.msra.mxu0 %v48
    %58 = vmatprep.subr.bf16.mxu0 0
    %59 = vmatpush1.bf16.msra.mxu0 %v49
    %60 = vmatprep.subr.bf16.mxu0 0
    %61 = vmatpush1.bf16.msra.mxu0 0
    %62 = vmatprep.subr.bf16.mxu0 0
    %63 = vmatpush1.bf16.msra.mxu0 0
    %64 = vmatprep.subr.bf16.mxu0 0
    %65 = vmatpush1.bf16.msra.mxu0 0
    %66 = vmatprep.subr.bf16.mxu0 0
    %67 = vmatpush1.bf16.msra.mxu0 0
    %68 = vmatprep.subr.bf16.mxu0 0
    %69 = vmatpush1.bf16.msra.mxu0 0
    %70 = vmatprep.subr.bf16.mxu0 0
    %71 = vmatpush1.bf16.msra.mxu0 0
    %72 = vmatprep.subr.bf16.mxu0 0
    %73 = vmatpush1.bf16.msra.mxu0 0
    %74 = vmatprep.subr.bf16.mxu0 0
    %75 = vmatpush1.bf16.msra.mxu0 0
    %76 = vmatprep.subr.bf16.mxu0 0
    %77 = vmatpush1.bf16.msra.mxu0 0
    %78 = vmatprep.subr.bf16.mxu0 0
    %79 = vmatpush1.bf16.msra.mxu0 0
    %80 = vmatprep.subr.bf16.mxu0 0
    %81 = vmatpush1.bf16.msra.mxu0 0
    %82 = vmatprep.subr.bf16.mxu0 0
    %83 = vmatpush1.bf16.msra.mxu0 0
    %84 = vmatprep.subr.bf16.mxu0 0
    %85 = vmatpush1.bf16.msra.mxu0 0
    %86 = vmatprep.subr.bf16.mxu0 0
    %87 = vmatpush1.bf16.msra.mxu0 0
    %88 = vmatprep.mubr.bf16.mxu0 0
    %89 = vmatmul.mubr.bf16.gmra.mrb[0].mxu0 %v54
    %v90 = vpop.f32.mrb[0].mxu0
    %v91 = vadd.f32 %v38, %v90
    %v92 = vpop.f32.mrb[0].mxu0
    %v93 = vpop.f32.mrb[0].mxu0
    %v94 = vpop.f32.mrb[0].mxu0
    %95 = vdwg.mxu0
    %v96 = vmax.f32 %v91, 0.0
    %v97 = vpack.c.bf16 %v96, %v96
    %v98 = vld [vmem:[%s3] sm:$0xf]
    %v99 = vld [vmem:[%s3 + $0x4] sm:$0xf]
    %v100 = vld [vmem:[%s3 + $0x8] sm:$0xf]
    %v101 = vld [vmem:[%s3 + $0xc] sm:$0xf]
    %v102 = vld [vmem:[%s3 + $0x10] sm:$0xf]
    %v103 = vld [vmem:[%s3 + $0x14] sm:$0xf]
    %v104 = vld [vmem:[%s3 + $0x18] sm:$0xf]
    %v105 = vld [vmem:[%s3 + $0x1c] sm:$0xf]
    %v106 = vld [vmem:[%s3 + $0x20] sm:$0xf]
    %v107 = vld [vmem:[%s3 + $0x24] sm:$0xf]
    %v108 = vld [vmem:[%s3 + $0x28] sm:$0xf]
    %v109 = vld [vmem:[%s3 + $0x2c] sm:$0xf]
    %v110 = vld [vmem:[%s3 + $0x30] sm:$0xf]
    %v111 = vld [vmem:[%s3 + $0x34] sm:$0xf]
    %v112 = vld [vmem:[%s3 + $0x38] sm:$0xf]
    %v113 = vld [vmem:[%s3 + $0x3c] sm:$0xf]
    %v114 = vld [vmem:[%s4] sm:$0x1]
    %v116 = vlaneseq
    %v117 = vshrl.u32 %v116, 7
    %v118 = vsub.s32 0, %v117
    %v119 = vrot.slane %v114, %v118
    %v137 = vunpack.c.l.b16 %v98
    %v138 = vunpack.c.l.b16 %v99
    %v139 = vunpack.c.l.b16 %v100
    %v140 = vunpack.c.l.b16 %v101
    %v141 = vunpack.c.l.b16 %v102
    %v142 = vunpack.c.l.b16 %v103
    %v143 = vunpack.c.l.b16 %v104
    %v144 = vunpack.c.l.b16 %v105
    %v145 = vunpack.c.l.b16 %v106
    %v146 = vunpack.c.l.b16 %v107
    %v147 = vunpack.c.l.b16 %v108
    %v148 = vunpack.c.l.b16 %v109
    %v149 = vunpack.c.l.b16 %v110
    %v150 = vunpack.c.l.b16 %v111
    %v151 = vunpack.c.l.b16 %v112
    %v152 = vunpack.c.l.b16 %v113
    %v153 = vpack.c.b16 %v138, %v137
    %v154 = vpack.c.b16 %v140, %v139
    %v155 = vpack.c.b16 %v142, %v141
    %v156 = vpack.c.b16 %v144, %v143
    %v157 = vpack.c.b16 %v146, %v145
    %v158 = vpack.c.b16 %v148, %v147
    %v159 = vpack.c.b16 %v150, %v149
    %v160 = vpack.c.b16 %v152, %v151
    %169 = vmatprep.subr.bf16.mxu0 0
    %170 = vmatpush1.bf16.msra.mxu0 %v153
    %171 = vmatprep.subr.bf16.mxu0 0
    %172 = vmatpush1.bf16.msra.mxu0 %v154
    %173 = vmatprep.subr.bf16.mxu0 0
    %174 = vmatpush1.bf16.msra.mxu0 %v155
    %175 = vmatprep.subr.bf16.mxu0 0
    %176 = vmatpush1.bf16.msra.mxu0 %v156
    %177 = vmatprep.subr.bf16.mxu0 0
    %178 = vmatpush1.bf16.msra.mxu0 %v157
    %179 = vmatprep.subr.bf16.mxu0 0
    %180 = vmatpush1.bf16.msra.mxu0 %v158
    %181 = vmatprep.subr.bf16.mxu0 0
    %182 = vmatpush1.bf16.msra.mxu0 %v159
    %183 = vmatprep.subr.bf16.mxu0 0
    %184 = vmatpush1.bf16.msra.mxu0 %v160
    %185 = vmatprep.subr.bf16.mxu0 0
    %186 = vmatpush1.bf16.msra.mxu0 0
    %187 = vmatprep.subr.bf16.mxu0 0
    %188 = vmatpush1.bf16.msra.mxu0 0
    %189 = vmatprep.subr.bf16.mxu0 0
    %190 = vmatpush1.bf16.msra.mxu0 0
    %191 = vmatprep.subr.bf16.mxu0 0
    %192 = vmatpush1.bf16.msra.mxu0 0
    %193 = vmatprep.subr.bf16.mxu0 0
    %194 = vmatpush1.bf16.msra.mxu0 0
    %195 = vmatprep.subr.bf16.mxu0 0
    %196 = vmatpush1.bf16.msra.mxu0 0
    %197 = vmatprep.subr.bf16.mxu0 0
    %198 = vmatpush1.bf16.msra.mxu0 0
    %199 = vmatprep.subr.bf16.mxu0 0
    %200 = vmatpush1.bf16.msra.mxu0 0
    %201 = vmatprep.mubr.bf16.mxu0 0
    %202 = vmatmul.mubr.bf16.gmra.mrb[0].mxu0 %v97
    %v203 = vpop.f32.mrb[0].mxu0
    %v204 = vadd.f32 %v119, %v203
    %v205 = vpop.f32.mrb[0].mxu0
    %v206 = vpop.f32.mrb[0].mxu0
    %v207 = vpop.f32.mrb[0].mxu0
    %208 = vdwg.mxu0
    %v209 = vmax.f32 %v204, 0.0
    %v210 = vpack.c.bf16 %v209, %v209
    %v211 = vld [vmem:[%s5] sm:$0xf]
    %v212 = vld [vmem:[%s5 + $0x4] sm:$0xf]
    %v213 = vld [vmem:[%s5 + $0x8] sm:$0xf]
    %v214 = vld [vmem:[%s5 + $0xc] sm:$0xf]
    %v215 = vld [vmem:[%s5 + $0x10] sm:$0xf]
    %v216 = vld [vmem:[%s5 + $0x14] sm:$0xf]
    %v217 = vld [vmem:[%s5 + $0x18] sm:$0xf]
    %v218 = vld [vmem:[%s5 + $0x1c] sm:$0xf]
    %v219 = vld [vmem:[%s5 + $0x20] sm:$0xf]
    %v220 = vld [vmem:[%s5 + $0x24] sm:$0xf]
    %v221 = vld [vmem:[%s5 + $0x28] sm:$0xf]
    %v222 = vld [vmem:[%s5 + $0x2c] sm:$0xf]
    %v223 = vld [vmem:[%s5 + $0x30] sm:$0xf]
    %v224 = vld [vmem:[%s5 + $0x34] sm:$0xf]
    %v225 = vld [vmem:[%s5 + $0x38] sm:$0xf]
    %v226 = vld [vmem:[%s5 + $0x3c] sm:$0xf]
    %v227 = vld [vmem:[%s6] sm:$0x1]
    %v229 = vlaneseq
    %v230 = vshrl.u32 %v229, 7
    %v231 = vsub.s32 0, %v230
    %v232 = vrot.slane %v227, %v231
    %v250 = vunpack.c.l.b16 %v211
    %v251 = vunpack.c.l.b16 %v212
    %v252 = vunpack.c.l.b16 %v213
    %v253 = vunpack.c.l.b16 %v214
    %v254 = vunpack.c.l.b16 %v215
    %v255 = vunpack.c.l.b16 %v216
    %v256 = vunpack.c.l.b16 %v217
    %v257 = vunpack.c.l.b16 %v218
    %v258 = vunpack.c.l.b16 %v219
    %v259 = vunpack.c.l.b16 %v220
    %v260 = vunpack.c.l.b16 %v221
    %v261 = vunpack.c.l.b16 %v222
    %v262 = vunpack.c.l.b16 %v223
    %v263 = vunpack.c.l.b16 %v224
    %v264 = vunpack.c.l.b16 %v225
    %v265 = vunpack.c.l.b16 %v226
    %v266 = vpack.c.b16 %v251, %v250
    %v267 = vpack.c.b16 %v253, %v252
    %v268 = vpack.c.b16 %v255, %v254
    %v269 = vpack.c.b16 %v257, %v256
    %v270 = vpack.c.b16 %v259, %v258
    %v271 = vpack.c.b16 %v261, %v260
    %v272 = vpack.c.b16 %v263, %v262
    %v273 = vpack.c.b16 %v265, %v264
    %282 = vmatprep.subr.bf16.mxu0 0
    %283 = vmatpush1.bf16.msra.mxu0 %v266
    %284 = vmatprep.subr.bf16.mxu0 0
    %285 = vmatpush1.bf16.msra.mxu0 %v267
    %286 = vmatprep.subr.bf16.mxu0 0
    %287 = vmatpush1.bf16.msra.mxu0 %v268
    %288 = vmatprep.subr.bf16.mxu0 0
    %289 = vmatpush1.bf16.msra.mxu0 %v269
    %290 = vmatprep.subr.bf16.mxu0 0
    %291 = vmatpush1.bf16.msra.mxu0 %v270
    %292 = vmatprep.subr.bf16.mxu0 0
    %293 = vmatpush1.bf16.msra.mxu0 %v271
    %294 = vmatprep.subr.bf16.mxu0 0
    %295 = vmatpush1.bf16.msra.mxu0 %v272
    %296 = vmatprep.subr.bf16.mxu0 0
    %297 = vmatpush1.bf16.msra.mxu0 %v273
    %298 = vmatprep.subr.bf16.mxu0 0
    %299 = vmatpush1.bf16.msra.mxu0 0
    %300 = vmatprep.subr.bf16.mxu0 0
    %301 = vmatpush1.bf16.msra.mxu0 0
    %302 = vmatprep.subr.bf16.mxu0 0
    %303 = vmatpush1.bf16.msra.mxu0 0
    %304 = vmatprep.subr.bf16.mxu0 0
    %305 = vmatpush1.bf16.msra.mxu0 0
    %306 = vmatprep.subr.bf16.mxu0 0
    %307 = vmatpush1.bf16.msra.mxu0 0
    %308 = vmatprep.subr.bf16.mxu0 0
    %309 = vmatpush1.bf16.msra.mxu0 0
    %310 = vmatprep.subr.bf16.mxu0 0
    %311 = vmatpush1.bf16.msra.mxu0 0
    %312 = vmatprep.subr.bf16.mxu0 0
    %313 = vmatpush1.bf16.msra.mxu0 0
    %314 = vmatprep.mubr.bf16.mxu0 0
    %315 = vmatmul.mubr.bf16.gmra.mrb[0].mxu0 %v210
    %v316 = vpop.f32.mrb[0].mxu0
    %v317 = vadd.f32 %v232, %v316
    %v318 = vpop.f32.mrb[0].mxu0
    %v319 = vpop.f32.mrb[0].mxu0
    %v320 = vpop.f32.mrb[0].mxu0
    %321 = vdwg.mxu0
    %322 = vmax.xlane.f32.xlu0 %v317
    %v323 = vpop.xlane.xlu0 %322
    %v324 = vsub.f32 %v317, %v323
    %v325 = vmul.f32 %v324, 1.442695
    %v326 = vpow.pop %v325
    %327 = vadd.xlane.f32.xlu0 %v326
    %v328 = vpop.xlane.xlu0 %327
    %v329 = vrcp.pop %v328
    %v330 = vmul.f32 %v326, %v329
    %331 = vst [vmem:[#allocation2] sm:$0xff] %v330
    // Predicated region
    $region30: #{actor_forward.1} parent=1 // pred_check
      _
    $region31: #{actor_forward.1} parent=1 // pred_check_branch
      %333 = sbr.rel (0) target = $region33
    $region32: #{actor_forward.1} parent=1 // pred_region
      %s335 = ssub.s32 128, 128
      %336 = vsyncadd [#allocation3], %s335
      %s338 = sshll.u32 [#allocation2], 4
      %s339 = int_to_ptr.vmem [resolvable:$true] %s338
      %341 = dma.vmem_to_hbm [thread:$0]  %s339, 128, %s7, [#allocation3]
    $region33: #{actor_forward.1} parent=1 // pred_fallthru
      _
    // Predicated region
    $region34: #{actor_forward.1} parent=1 // pred_check
      _
    $region35: #{actor_forward.1} parent=1 // pred_check_branch
      %343 = sbr.rel (0) target = $region37
    $region36: #{actor_forward.1} parent=1 // pred_region
      %344 = dma.done [#allocation3], 128
    $region37: #{actor_forward.1} parent=1 // pred_fallthru
      _
    %345 = vsyncpa [#allocation3], 1

</llo_original>
